<compile_context>
chip_gen: v6e
topology: v6e:2x2x1
jax: 0.10.0
libtpu: 0.0.40
codegen_flags: <defaults>
</compile_context>

<pallas_src>
import functools

import jax
import jax.numpy as jnp
from jax import lax
from jax.experimental import pallas as pl
from jax.experimental.pallas import tpu as pltpu


def _image_proj_kernel(x_ref, w_ref, b_ref, gamma_ref, beta_ref, o_ref,
                       *, d, k, inv_d, eps):
    # x_ref:     (B, E)     VMEM, replicated across the grid (weight dtype)
    # w_ref:     (E, k*D)   VMEM, column tile j of the (E, T*D) weight (native dtype)
    # b_ref:     (1, k*D)   VMEM, f32 bias tile j
    # gamma_ref: (1, D)     VMEM, f32 LayerNorm weight (replicated)
    # beta_ref:  (1, D)     VMEM, f32 LayerNorm bias (replicated)
    # o_ref:     (B, k*D)   VMEM, lane-dense output tile j of the (B, T*D) slab

    # MXU matmul with f32 accumulation; inputs stay in their native dtype
    # (no full-weight f32 cast -> streamed HBM bytes stay at storage width).
    y = jnp.dot(x_ref[...], w_ref[...], preferred_element_type=jnp.float32)
    y = y + b_ref[...]

    gamma = gamma_ref[...]
    beta = beta_ref[...]

    # k independent LayerNorm groups, one per token, on static 128-aligned
    # lane slices (no reshape / relayout).  sum(y) and sum(y*y) reductions are
    # independent, so both XLU reductions can issue back-to-back.
    for i in range(k):
        yi = y[:, i * d:(i + 1) * d]
        mean = jnp.sum(yi, axis=-1, keepdims=True) * inv_d
        ex2 = jnp.sum(yi * yi, axis=-1, keepdims=True) * inv_d
        var = jnp.maximum(ex2 - mean * mean, 0.0)
        y_norm = (yi - mean) * lax.rsqrt(var + eps)
        out = y_norm * gamma + beta
        o_ref[:, i * d:(i + 1) * d] = out.astype(o_ref.dtype)


def image_proj_model(image_embeds, w, b, gamma, beta, *,
                     clip_extra_context_tokens, cross_attention_dim,
                     eps=1e-5, tokens_per_tile=None):
    """image_embeds: (B, E) -> (B, T, D)."""
    B, E = image_embeds.shape
    T, D = clip_extra_context_tokens, cross_attention_dim
    assert w.shape == (E, T * D), w.shape
    assert b.shape == (T * D,), b.shape
    assert gamma.shape == (D,) and beta.shape == (D,)
    # Sub-blocks of the (*, T*D) arrays must stay lane-dense / 128-aligned.
    assert D % 128 == 0, "cross_attention_dim must be a multiple of 128"

    out_dtype = image_embeds.dtype

    # --- choose tokens per grid step -------------------------------------
    # Keep the double-buffered weight tile comfortably inside the default
    # 32 MiB scoped VMEM (safe on v7x's 64 MiB physical VMEM too); for typical
    # shapes this gives grid=(1,) (full weight resident), which removes all
    # per-step pipeline overhead.  Override with tokens_per_tile for tuning.
    if tokens_per_tile is None:
        per_token_bytes = E * D * w.dtype.itemsize
        budget = 8 * 1024 * 1024
        k = max(1, min(T, budget // max(per_token_bytes, 1)))
        while T % k:
            k -= 1
    else:
        k = int(tokens_per_tile)
    assert 1 <= k <= T and T % k == 0, (k, T)
    grid = (T // k,)

    # --- prepare inputs ----------------------------------------------------
    # x is tiny (B x E): cast it to the weight dtype so the MXU gets a single
    # clean dtype pair (e.g. bf16 x bf16 -> f32 accumulation).
    x_in = image_embeds.astype(w.dtype)
    # Small params as f32 so the kernel has zero per-step VALU casts.
    b_in = b.astype(jnp.float32).reshape(1, T * D)
    gamma_in = gamma.astype(jnp.float32).reshape(1, D)
    beta_in = beta.astype(jnp.float32).reshape(1, D)

    # --- VMEM budget / scheduler hint ---------------------------------------
    tile_bytes = (E * (k * D) * w.dtype.itemsize          # weight tile
                  + B * (k * D) * jnp.dtype(out_dtype).itemsize  # output tile
                  + (k * D) * 4)                           # bias tile
    fixed_bytes = B * E * x_in.dtype.itemsize + 2 * D * 4  # x, gamma, beta
    vmem_limit = int(2 * (tile_bytes + fixed_bytes) + (1 << 20))
    vmem_limit = max(vmem_limit, 16 * 1024 * 1024)

    bytes_accessed = int(w.nbytes + x_in.nbytes + b_in.nbytes
                         + gamma_in.nbytes + beta_in.nbytes
                         + B * T * D * jnp.dtype(out_dtype).itemsize)
    cost = pl.CostEstimate(flops=2 * B * E * T * D,
                           transcendentals=B * T,
                           bytes_accessed=bytes_accessed)

    kernel = functools.partial(_image_proj_kernel,
                               d=D, k=k, inv_d=1.0 / D, eps=eps)

    out_2d = pl.pallas_call(
        kernel,
        out_shape=jax.ShapeDtypeStruct((B, T * D), out_dtype),
        grid=grid,
        in_specs=[
            # x replicated across all output tiles.
            pl.BlockSpec((B, E), lambda j: (0, 0)),
            # Weight streamed one k*D-wide column slab at a time (double-buffered).
            pl.BlockSpec((E, k * D), lambda j: (0, j)),
            # Bias tile matching the weight slab.
            pl.BlockSpec((1, k * D), lambda j: (0, j)),
            # LayerNorm params replicated.
            pl.BlockSpec((1, D), lambda j: (0, 0)),
            pl.BlockSpec((1, D), lambda j: (0, 0)),
        ],
        # Lane-dense 2-D output slab; each grid step writes one k*D-wide column.
        out_specs=pl.BlockSpec((B, k * D), lambda j: (0, j)),
        compiler_params=pltpu.CompilerParams(
            dimension_semantics=("parallel",),
            vmem_limit_bytes=vmem_limit),
        cost_estimate=cost,
    )(x_in, w, b_in, gamma_in, beta_in)

    # Free metadata reshape in the wrapper (keeps the kernel store lane-dense).
    return out_2d.reshape(B, T, D)


def _reference(image_embeds, w, b, gamma, beta, T, D, eps=1e-5):
    # Precision-matched reference: quantize x/w exactly as the kernel sees them
    # (bf16 storage), then do the math in f32.
    x_q = image_embeds.astype(w.dtype).astype(jnp.float32)
    w_q = w.astype(jnp.float32)
    y = jnp.dot(x_q, w_q, precision=lax.Precision.HIGHEST) + b.astype(jnp.float32)
    y = y.reshape(-1, T, D)
    mean = jnp.mean(y, axis=-1, keepdims=True)
    var = jnp.mean((y - mean) ** 2, axis=-1, keepdims=True)
    return ((y - mean) * lax.rsqrt(var + eps)) * gamma.astype(jnp.float32) \
        + beta.astype(jnp.float32)


if __name__ == "__main__":
    # Small shapes consistent with the module's forward pass.
    B = 2        # batch of image embeddings
    E = 128      # clip_embeddings_dim (small synthetic)
    D = 128      # cross_attention_dim (small synthetic)
    T = 4        # clip_extra_context_tokens

    key = jax.random.PRNGKey(0)
    k_x, k_w, k_b, k_g, k_beta = jax.random.split(key, 5)

    image_embeds = jax.random.normal(k_x, (B, E), dtype=jnp.float32)
    # Linear weight stored as (E, T*D) and streamed in bf16 (HBM-BW-bound op;
    # bf16 halves streamed bytes).  TODO(synk): fp8 (v7x) / int8 (v5e/v6e)
    # weight storage with a per-column dequant scale for a further ~2x.
    w_f32 = jax.random.normal(k_w, (E, T * D), dtype=jnp.float32) * (1.0 / jnp.sqrt(E))
    w = w_f32.astype(jnp.bfloat16)
    b = jax.random.normal(k_b, (T * D,), dtype=jnp.float32) * 0.01
    gamma = jnp.ones((D,), dtype=jnp.float32) + 0.1 * jax.random.normal(k_g, (D,), dtype=jnp.float32)
    beta = 0.1 * jax.random.normal(k_beta, (D,), dtype=jnp.float32)

    out = image_proj_model(
        image_embeds, w, b, gamma, beta,
        clip_extra_context_tokens=T, cross_attention_dim=D)
    out = jax.block_until_ready(out)

    ref = _reference(image_embeds, w, b, gamma, beta, T, D)
    assert out.shape == (B, T, D), out.shape
    assert jnp.allclose(out.astype(jnp.float32), ref, atol=5e-3, rtol=5e-3), \
        "mismatch vs reference"

    print("KERNEL_OK")
</pallas_src>

<mosaic_0001>
module attributes {stable_mosaic.version = 11 : i64} {
  func.func @_image_proj_kernel(%arg0: i32, %arg1: memref<2x128xbf16, #tpu.memory_space<vmem>>, %arg2: memref<128x512xbf16, #tpu.memory_space<vmem>>, %arg3: memref<1x512xf32, #tpu.memory_space<vmem>>, %arg4: memref<1x128xf32, #tpu.memory_space<vmem>>, %arg5: memref<1x128xf32, #tpu.memory_space<vmem>>, %arg6: memref<2x512xf32, #tpu.memory_space<vmem>>) attributes {dimension_semantics = [#tpu.dimension_semantics<parallel>], iteration_bounds = array<i64: 1>, scalar_prefetch = 0 : i64, scratch_operands = 0 : i64, tpu.core_type = #tpu.core_type<tc>, window_params = [{pipeline_mode = #tpu.pipeline_mode<synchronous>, transform_indices = @transform_0, window_bounds = array<i64: 2, 128>}, {transform_indices = @transform_1, window_bounds = array<i64: 128, 512>}, {transform_indices = @transform_2, window_bounds = array<i64: 1, 512>}, {pipeline_mode = #tpu.pipeline_mode<synchronous>, transform_indices = @transform_3, window_bounds = array<i64: 1, 128>}, {pipeline_mode = #tpu.pipeline_mode<synchronous>, transform_indices = @transform_4, window_bounds = array<i64: 1, 128>}, {transform_indices = @transform_5, window_bounds = array<i64: 2, 512>}]} {
    %c0 = arith.constant 0 : index
    %c0_0 = arith.constant 0 : index
    %0 = vector.load %arg1[%c0, %c0_0] : memref<2x128xbf16, #tpu.memory_space<vmem>>, vector<2x128xbf16>
    %c0_1 = arith.constant 0 : index
    %c0_2 = arith.constant 0 : index
    %1 = vector.load %arg2[%c0_1, %c0_2] : memref<128x512xbf16, #tpu.memory_space<vmem>>, vector<128x512xbf16>
    %cst = arith.constant dense<0.000000e+00> : vector<2x512xf32>
    %2 = tpu.matmul %0, %1, %cst {dimension_numbers = #tpu.dot_dimension_numbers<[1], [0], [0], [1], [0, 0, 1, 1], [], []>} : vector<2x128xbf16>, vector<128x512xbf16>, vector<2x512xf32> -> vector<2x512xf32>
    %c0_3 = arith.constant 0 : index
    %c0_4 = arith.constant 0 : index
    %3 = vector.load %arg3[%c0_3, %c0_4] : memref<1x512xf32, #tpu.memory_space<vmem>>, vector<1x512xf32>
    %4 = vector.broadcast %3 : vector<1x512xf32> to vector<2x512xf32>
    %5 = arith.addf %2, %4 : vector<2x512xf32>
    %c0_5 = arith.constant 0 : index
    %c0_6 = arith.constant 0 : index
    %6 = vector.load %arg4[%c0_5, %c0_6] : memref<1x128xf32, #tpu.memory_space<vmem>>, vector<1x128xf32>
    %c0_7 = arith.constant 0 : index
    %c0_8 = arith.constant 0 : index
    %7 = vector.load %arg5[%c0_7, %c0_8] : memref<1x128xf32, #tpu.memory_space<vmem>>, vector<1x128xf32>
    %8 = vector.extract_strided_slice %5 {offsets = [0, 0], sizes = [2, 128], strides = [1, 1]} : vector<2x512xf32> to vector<2x128xf32>
    %cst_9 = arith.constant dense<0.000000e+00> : vector<2xf32>
    %9 = vector.multi_reduction <add>, %8, %cst_9 [1] : vector<2x128xf32> to vector<2xf32>
    %10 = vector.shape_cast %9 : vector<2xf32> to vector<2x1xf32>
    %cst_10 = arith.constant 7.812500e-03 : f32
    %11 = vector.broadcast %cst_10 : f32 to vector<2x1xf32>
    %12 = arith.mulf %10, %11 : vector<2x1xf32>
    %13 = arith.mulf %8, %8 : vector<2x128xf32>
    %cst_11 = arith.constant dense<0.000000e+00> : vector<2xf32>
    %14 = vector.multi_reduction <add>, %13, %cst_11 [1] : vector<2x128xf32> to vector<2xf32>
    %15 = vector.shape_cast %14 : vector<2xf32> to vector<2x1xf32>
    %cst_12 = arith.constant 7.812500e-03 : f32
    %16 = vector.broadcast %cst_12 : f32 to vector<2x1xf32>
    %17 = arith.mulf %15, %16 : vector<2x1xf32>
    %18 = arith.mulf %12, %12 : vector<2x1xf32>
    %19 = arith.subf %17, %18 : vector<2x1xf32>
    %cst_13 = arith.constant 0.000000e+00 : f32
    %20 = vector.broadcast %cst_13 : f32 to vector<2x1xf32>
    %21 = arith.maximumf %19, %20 : vector<2x1xf32>
    %22 = vector.broadcast %12 : vector<2x1xf32> to vector<2x128xf32>
    %23 = arith.subf %8, %22 : vector<2x128xf32>
    %cst_14 = arith.constant 9.99999974E-6 : f32
    %24 = vector.broadcast %cst_14 : f32 to vector<2x1xf32>
    %25 = arith.addf %21, %24 : vector<2x1xf32>
    %26 = math.rsqrt %25 : vector<2x1xf32>
    %27 = vector.broadcast %26 : vector<2x1xf32> to vector<2x128xf32>
    %28 = arith.mulf %23, %27 : vector<2x128xf32>
    %29 = vector.broadcast %6 : vector<1x128xf32> to vector<2x128xf32>
    %30 = arith.mulf %28, %29 : vector<2x128xf32>
    %31 = vector.broadcast %7 : vector<1x128xf32> to vector<2x128xf32>
    %32 = arith.addf %30, %31 : vector<2x128xf32>
    %c0_15 = arith.constant 0 : index
    %c0_16 = arith.constant 0 : index
    %33 = vector.load %arg6[%c0_15, %c0_16] : memref<2x512xf32, #tpu.memory_space<vmem>>, vector<2x128xf32>
    tpu.vector_store %arg6[%c0_15, %c0_16], %32 {strides = array<i32>} : memref<2x512xf32, #tpu.memory_space<vmem>>, vector<2x128xf32>,
    %34 = vector.extract_strided_slice %5 {offsets = [0, 128], sizes = [2, 128], strides = [1, 1]} : vector<2x512xf32> to vector<2x128xf32>
    %cst_17 = arith.constant dense<0.000000e+00> : vector<2xf32>
    %35 = vector.multi_reduction <add>, %34, %cst_17 [1] : vector<2x128xf32> to vector<2xf32>
    %36 = vector.shape_cast %35 : vector<2xf32> to vector<2x1xf32>
    %cst_18 = arith.constant 7.812500e-03 : f32
    %37 = vector.broadcast %cst_18 : f32 to vector<2x1xf32>
    %38 = arith.mulf %36, %37 : vector<2x1xf32>
    %39 = arith.mulf %34, %34 : vector<2x128xf32>
    %cst_19 = arith.constant dense<0.000000e+00> : vector<2xf32>
    %40 = vector.multi_reduction <add>, %39, %cst_19 [1] : vector<2x128xf32> to vector<2xf32>
    %41 = vector.shape_cast %40 : vector<2xf32> to vector<2x1xf32>
    %cst_20 = arith.constant 7.812500e-03 : f32
    %42 = vector.broadcast %cst_20 : f32 to vector<2x1xf32>
    %43 = arith.mulf %41, %42 : vector<2x1xf32>
    %44 = arith.mulf %38, %38 : vector<2x1xf32>
    %45 = arith.subf %43, %44 : vector<2x1xf32>
    %cst_21 = arith.constant 0.000000e+00 : f32
    %46 = vector.broadcast %cst_21 : f32 to vector<2x1xf32>
    %47 = arith.maximumf %45, %46 : vector<2x1xf32>
    %48 = vector.broadcast %38 : vector<2x1xf32> to vector<2x128xf32>
    %49 = arith.subf %34, %48 : vector<2x128xf32>
    %cst_22 = arith.constant 9.99999974E-6 : f32
    %50 = vector.broadcast %cst_22 : f32 to vector<2x1xf32>
    %51 = arith.addf %47, %50 : vector<2x1xf32>
    %52 = math.rsqrt %51 : vector<2x1xf32>
    %53 = vector.broadcast %52 : vector<2x1xf32> to vector<2x128xf32>
    %54 = arith.mulf %49, %53 : vector<2x128xf32>
    %55 = vector.broadcast %6 : vector<1x128xf32> to vector<2x128xf32>
    %56 = arith.mulf %54, %55 : vector<2x128xf32>
    %57 = vector.broadcast %7 : vector<1x128xf32> to vector<2x128xf32>
    %58 = arith.addf %56, %57 : vector<2x128xf32>
    %c0_23 = arith.constant 0 : index
    %c128 = arith.constant 128 : index
    %59 = vector.load %arg6[%c0_23, %c128] : memref<2x512xf32, #tpu.memory_space<vmem>>, vector<2x128xf32>
    tpu.vector_store %arg6[%c0_23, %c128], %58 {strides = array<i32>} : memref<2x512xf32, #tpu.memory_space<vmem>>, vector<2x128xf32>,
    %60 = vector.extract_strided_slice %5 {offsets = [0, 256], sizes = [2, 128], strides = [1, 1]} : vector<2x512xf32> to vector<2x128xf32>
    %cst_24 = arith.constant dense<0.000000e+00> : vector<2xf32>
    %61 = vector.multi_reduction <add>, %60, %cst_24 [1] : vector<2x128xf32> to vector<2xf32>
    %62 = vector.shape_cast %61 : vector<2xf32> to vector<2x1xf32>
    %cst_25 = arith.constant 7.812500e-03 : f32
    %63 = vector.broadcast %cst_25 : f32 to vector<2x1xf32>
    %64 = arith.mulf %62, %63 : vector<2x1xf32>
    %65 = arith.mulf %60, %60 : vector<2x128xf32>
    %cst_26 = arith.constant dense<0.000000e+00> : vector<2xf32>
    %66 = vector.multi_reduction <add>, %65, %cst_26 [1] : vector<2x128xf32> to vector<2xf32>
    %67 = vector.shape_cast %66 : vector<2xf32> to vector<2x1xf32>
    %cst_27 = arith.constant 7.812500e-03 : f32
    %68 = vector.broadcast %cst_27 : f32 to vector<2x1xf32>
    %69 = arith.mulf %67, %68 : vector<2x1xf32>
    %70 = arith.mulf %64, %64 : vector<2x1xf32>
    %71 = arith.subf %69, %70 : vector<2x1xf32>
    %cst_28 = arith.constant 0.000000e+00 : f32
    %72 = vector.broadcast %cst_28 : f32 to vector<2x1xf32>
    %73 = arith.maximumf %71, %72 : vector<2x1xf32>
    %74 = vector.broadcast %64 : vector<2x1xf32> to vector<2x128xf32>
    %75 = arith.subf %60, %74 : vector<2x128xf32>
    %cst_29 = arith.constant 9.99999974E-6 : f32
    %76 = vector.broadcast %cst_29 : f32 to vector<2x1xf32>
    %77 = arith.addf %73, %76 : vector<2x1xf32>
    %78 = math.rsqrt %77 : vector<2x1xf32>
    %79 = vector.broadcast %78 : vector<2x1xf32> to vector<2x128xf32>
    %80 = arith.mulf %75, %79 : vector<2x128xf32>
    %81 = vector.broadcast %6 : vector<1x128xf32> to vector<2x128xf32>
    %82 = arith.mulf %80, %81 : vector<2x128xf32>
    %83 = vector.broadcast %7 : vector<1x128xf32> to vector<2x128xf32>
    %84 = arith.addf %82, %83 : vector<2x128xf32>
    %c0_30 = arith.constant 0 : index
    %c256 = arith.constant 256 : index
    %85 = vector.load %arg6[%c0_30, %c256] : memref<2x512xf32, #tpu.memory_space<vmem>>, vector<2x128xf32>
    tpu.vector_store %arg6[%c0_30, %c256], %84 {strides = array<i32>} : memref<2x512xf32, #tpu.memory_space<vmem>>, vector<2x128xf32>,
    %86 = vector.extract_strided_slice %5 {offsets = [0, 384], sizes = [2, 128], strides = [1, 1]} : vector<2x512xf32> to vector<2x128xf32>
    %cst_31 = arith.constant dense<0.000000e+00> : vector<2xf32>
    %87 = vector.multi_reduction <add>, %86, %cst_31 [1] : vector<2x128xf32> to vector<2xf32>
    %88 = vector.shape_cast %87 : vector<2xf32> to vector<2x1xf32>
    %cst_32 = arith.constant 7.812500e-03 : f32
    %89 = vector.broadcast %cst_32 : f32 to vector<2x1xf32>
    %90 = arith.mulf %88, %89 : vector<2x1xf32>
    %91 = arith.mulf %86, %86 : vector<2x128xf32>
    %cst_33 = arith.constant dense<0.000000e+00> : vector<2xf32>
    %92 = vector.multi_reduction <add>, %91, %cst_33 [1] : vector<2x128xf32> to vector<2xf32>
    %93 = vector.shape_cast %92 : vector<2xf32> to vector<2x1xf32>
    %cst_34 = arith.constant 7.812500e-03 : f32
    %94 = vector.broadcast %cst_34 : f32 to vector<2x1xf32>
    %95 = arith.mulf %93, %94 : vector<2x1xf32>
    %96 = arith.mulf %90, %90 : vector<2x1xf32>
    %97 = arith.subf %95, %96 : vector<2x1xf32>
    %cst_35 = arith.constant 0.000000e+00 : f32
    %98 = vector.broadcast %cst_35 : f32 to vector<2x1xf32>
    %99 = arith.maximumf %97, %98 : vector<2x1xf32>
    %100 = vector.broadcast %90 : vector<2x1xf32> to vector<2x128xf32>
    %101 = arith.subf %86, %100 : vector<2x128xf32>
    %cst_36 = arith.constant 9.99999974E-6 : f32
    %102 = vector.broadcast %cst_36 : f32 to vector<2x1xf32>
    %103 = arith.addf %99, %102 : vector<2x1xf32>
    %104 = math.rsqrt %103 : vector<2x1xf32>
    %105 = vector.broadcast %104 : vector<2x1xf32> to vector<2x128xf32>
    %106 = arith.mulf %101, %105 : vector<2x128xf32>
    %107 = vector.broadcast %6 : vector<1x128xf32> to vector<2x128xf32>
    %108 = arith.mulf %106, %107 : vector<2x128xf32>
    %109 = vector.broadcast %7 : vector<1x128xf32> to vector<2x128xf32>
    %110 = arith.addf %108, %109 : vector<2x128xf32>
    %c0_37 = arith.constant 0 : index
    %c384 = arith.constant 384 : index
    %111 = vector.load %arg6[%c0_37, %c384] : memref<2x512xf32, #tpu.memory_space<vmem>>, vector<2x128xf32>
    tpu.vector_store %arg6[%c0_37, %c384], %110 {strides = array<i32>} : memref<2x512xf32, #tpu.memory_space<vmem>>, vector<2x128xf32>,
    return
  }
  func.func @transform_0(%arg0: i32) -> (i32, i32) {
    %c0_i32 = arith.constant 0 : i32
    %c0_i32_0 = arith.constant 0 : i32
    %c0_i32_1 = arith.constant 0 : i32
    return %c0_i32, %c0_i32_0 : i32, i32
  }
  func.func @transform_1(%arg0: i32) -> (i32, i32) {
    %c0_i32 = arith.constant 0 : i32
    %c0_i32_0 = arith.constant 0 : i32
    return %c0_i32, %arg0 : i32, i32
  }
  func.func @transform_2(%arg0: i32) -> (i32, i32) {
    %c0_i32 = arith.constant 0 : i32
    %c0_i32_0 = arith.constant 0 : i32
    return %c0_i32, %arg0 : i32, i32
  }
  func.func @transform_3(%arg0: i32) -> (i32, i32) {
    %c0_i32 = arith.constant 0 : i32
    %c0_i32_0 = arith.constant 0 : i32
    %c0_i32_1 = arith.constant 0 : i32
    return %c0_i32, %c0_i32_0 : i32, i32
  }
  func.func @transform_4(%arg0: i32) -> (i32, i32) {
    %c0_i32 = arith.constant 0 : i32
    %c0_i32_0 = arith.constant 0 : i32
    %c0_i32_1 = arith.constant 0 : i32
    return %c0_i32, %c0_i32_0 : i32, i32
  }
  func.func @transform_5(%arg0: i32) -> (i32, i32) {
    %c0_i32 = arith.constant 0 : i32
    %c0_i32_0 = arith.constant 0 : i32
    return %c0_i32, %arg0 : i32, i32
  }
}

</mosaic_0001>

<llo_original>
// kernel: tpu_custom_call.1
$region0: #{tpu_custom_call.1}
  #allocation0 [shape = 'u32[]', space=smem, size = 0x4, offset = 0x4, fixed_abs, tag = 'smem constant byte address 0x4 - core index']
  #allocation1 [shape = 'u32[144,128]{1,0:T(1,128)}', space=vmem, size = 0x12000, scoped, tag = 'internal scratch']
  %s0 = inlined_call_operand.hbm [shape: bf16[2,128], index: 0, kind: input, shape index: {}]
  %s1 = inlined_call_operand.hbm [shape: bf16[128,512], index: 1, kind: input, shape index: {}]
  %s2 = inlined_call_operand.hbm [shape: f32[1,512], index: 2, kind: input, shape index: {}]
  %s3 = inlined_call_operand.vmem [shape: f32[1,128], index: 3, kind: input, shape index: {}]
  %s4 = inlined_call_operand.vmem [shape: f32[1,128], index: 4, kind: input, shape index: {}]
  %s5 = inlined_call_operand.hbm [shape: f32[2,512], index: 5, kind: output, shape index: {}]
  %s6 = sld [smem:[#allocation0]]
  $region42: #{tpu_custom_call.1} parent=0
    _
  %s8 = ssub.s32 1, %s6
  %s9 = scalar_select 0, %s8, %s6
  $region1: #{tpu_custom_call.1} parent=0
    #allocation2 [shape = 'u8[512]{0}', space=vmem, size = 0x400, scoped, tag = 'input window, operand 0, single buffered']
    #allocation3 [shape = 's32[1]{0}', space=sflag, size = 0x4, scoped, tag = 'scoped memory for tpu_custom_call.1']
    #allocation4 [shape = 's32[1]{0}', space=sflag, size = 0x4, scoped, tag = 'scoped memory for tpu_custom_call.1']
    #allocation5 [shape = 'u8[131072]{0}', space=vmem, size = 0x20000, scoped, tag = 'input window, operand 1, single buffered']
    #allocation6 [shape = 's32[1]{0}', space=sflag, size = 0x4, scoped, tag = 'scoped memory for tpu_custom_call.1']
    #allocation7 [shape = 'u8[2048]{0}', space=vmem, size = 0x800, scoped, tag = 'input window, operand 2, single buffered']
    #allocation8 [shape = 'u8[4096]{0}', space=vmem, size = 0x1000, scoped, tag = 'output window, operand 0, single buffered']
    %10 = vsyncpa [#allocation3], 0
    %11 = vsyncpa [#allocation6], 0
    %12 = vsyncpa [#allocation4], 0
    // Predicated region
    $region2: #{tpu_custom_call.1} parent=1 // pred_check
      _
    $region3: #{tpu_custom_call.1} parent=1 // pred_check_branch
      %14 = sbr.rel (0) target = $region5
    $region4: #{tpu_custom_call.1} parent=1 // pred_region
      %s16 = ssub.s32 16, 16
      %17 = vsyncadd [#allocation3], %s16
      %s19 = sshll.u32 [#allocation2], 4
      %s20 = int_to_ptr.vmem [resolvable:$true] %s19
      %22 = dma.hbm_to_vmem [thread:$0]  %s0, 16, %s20, [#allocation3]
    $region5: #{tpu_custom_call.1} parent=1 // pred_fallthru
      _
    // Predicated region
    $region6: #{tpu_custom_call.1} parent=1 // pred_check
      _
    $region7: #{tpu_custom_call.1} parent=1 // pred_check_branch
      %24 = sbr.rel (0) target = $region9
    $region8: #{tpu_custom_call.1} parent=1 // pred_region
      %s26 = ssub.s32 4096, 4096
      %27 = vsyncadd [#allocation6], %s26
      %s28 = sshll.u32 [#allocation5], 4
      %s29 = int_to_ptr.vmem [resolvable:$true] %s28
      %34 = dma.hbm_to_vmem [thread:$0]  %s1, 4096, %s29, [#allocation6], 256, 256, 16
    $region9: #{tpu_custom_call.1} parent=1 // pred_fallthru
      _
    // Predicated region
    $region10: #{tpu_custom_call.1} parent=1 // pred_check
      _
    $region11: #{tpu_custom_call.1} parent=1 // pred_check_branch
      %36 = sbr.rel (0) target = $region13
    $region12: #{tpu_custom_call.1} parent=1 // pred_region
      %s38 = ssub.s32 64, 64
      %39 = vsyncadd [#allocation6], %s38
      %s41 = sshll.u32 [#allocation7], 4
      %s42 = int_to_ptr.vmem [resolvable:$true] %s41
      %44 = dma.hbm_to_vmem [thread:$0]  %s2, 64, %s42, [#allocation6]
    $region13: #{tpu_custom_call.1} parent=1 // pred_fallthru
      _
    // Predicated region
    $region14: #{tpu_custom_call.1} parent=1 // pred_check
      _
    $region15: #{tpu_custom_call.1} parent=1 // pred_check_branch
      %46 = sbr.rel (0) target = $region17
    $region16: #{tpu_custom_call.1} parent=1 // pred_region
      _
    $region17: #{tpu_custom_call.1} parent=1 // pred_fallthru
      _
    // Predicated region
    $region18: #{tpu_custom_call.1} parent=1 // pred_check
      _
    $region19: #{tpu_custom_call.1} parent=1 // pred_check_branch
      %48 = sbr.rel (0) target = $region21
    $region20: #{tpu_custom_call.1} parent=1 // pred_region
      _
    $region21: #{tpu_custom_call.1} parent=1 // pred_fallthru
      _
    // Predicated region
    $region22: #{tpu_custom_call.1} parent=1 // pred_check
      _
    $region23: #{tpu_custom_call.1} parent=1 // pred_check_branch
      %50 = sbr.rel (0) target = $region25
    $region24: #{tpu_custom_call.1} parent=1 // pred_region
      %51 = dma.done [#allocation3], 16
    $region25: #{tpu_custom_call.1} parent=1 // pred_fallthru
      _
    // Predicated region
    $region26: #{tpu_custom_call.1} parent=1 // pred_check
      _
    $region27: #{tpu_custom_call.1} parent=1 // pred_check_branch
      %53 = sbr.rel (0) target = $region29
    $region28: #{tpu_custom_call.1} parent=1 // pred_region
      %54 = dma.done [#allocation6], 4096
    $region29: #{tpu_custom_call.1} parent=1 // pred_fallthru
      _
    // Predicated region
    $region30: #{tpu_custom_call.1} parent=1 // pred_check
      _
    $region31: #{tpu_custom_call.1} parent=1 // pred_check_branch
      %56 = sbr.rel (0) target = $region33
    $region32: #{tpu_custom_call.1} parent=1 // pred_region
      %57 = dma.done [#allocation6], 64
    $region33: #{tpu_custom_call.1} parent=1 // pred_fallthru
      _
    %v59 = vld [vmem:[#allocation2] sm:$0x1]
    %v60 = vld [vmem:[#allocation5] sm:$0xff]
    %v61 = vld [vmem:[#allocation5 + $0x8] sm:$0xff]
    %v62 = vld [vmem:[#allocation5 + $0x10] sm:$0xff]
    %v63 = vld [vmem:[#allocation5 + $0x18] sm:$0xff]
    %v64 = vld [vmem:[#allocation5 + $0x20] sm:$0xff]
    %v65 = vld [vmem:[#allocation5 + $0x28] sm:$0xff]
    %v66 = vld [vmem:[#allocation5 + $0x30] sm:$0xff]
    %v67 = vld [vmem:[#allocation5 + $0x38] sm:$0xff]
    %v68 = vld [vmem:[#allocation5 + $0x40] sm:$0xff]
    %v69 = vld [vmem:[#allocation5 + $0x48] sm:$0xff]
    %v70 = vld [vmem:[#allocation5 + $0x50] sm:$0xff]
    %v71 = vld [vmem:[#allocation5 + $0x58] sm:$0xff]
    %v72 = vld [vmem:[#allocation5 + $0x60] sm:$0xff]
    %v73 = vld [vmem:[#allocation5 + $0x68] sm:$0xff]
    %v74 = vld [vmem:[#allocation5 + $0x70] sm:$0xff]
    %v75 = vld [vmem:[#allocation5 + $0x78] sm:$0xff]
    %v76 = vld [vmem:[#allocation5 + $0x80] sm:$0xff]
    %v77 = vld [vmem:[#allocation5 + $0x88] sm:$0xff]
    %v78 = vld [vmem:[#allocation5 + $0x90] sm:$0xff]
    %v79 = vld [vmem:[#allocation5 + $0x98] sm:$0xff]
    %v80 = vld [vmem:[#allocation5 + $0xa0] sm:$0xff]
    %v81 = vld [vmem:[#allocation5 + $0xa8] sm:$0xff]
    %v82 = vld [vmem:[#allocation5 + $0xb0] sm:$0xff]
    %v83 = vld [vmem:[#allocation5 + $0xb8] sm:$0xff]
    %v84 = vld [vmem:[#allocation5 + $0xc0] sm:$0xff]
    %v85 = vld [vmem:[#allocation5 + $0xc8] sm:$0xff]
    %v86 = vld [vmem:[#allocation5 + $0xd0] sm:$0xff]
    %v87 = vld [vmem:[#allocation5 + $0xd8] sm:$0xff]
    %v88 = vld [vmem:[#allocation5 + $0xe0] sm:$0xff]
    %v89 = vld [vmem:[#allocation5 + $0xe8] sm:$0xff]
    %v90 = vld [vmem:[#allocation5 + $0xf0] sm:$0xff]
    %v91 = vld [vmem:[#allocation5 + $0xf8] sm:$0xff]
    %v92 = vld [vmem:[#allocation7] sm:$0xf]
    %v94 = vlaneseq
    %v95 = vshrl.u32 %v94, 7
    %v96 = vsub.s32 0, %v95
    %v97 = vrot.slane %v92, %v96
    %v98 = vlaneseq
    %v99 = vshrl.u32 %v98, 7
    %v100 = vsub.s32 1, %v99
    %v101 = vrot.slane %v92, %v100
    %v102 = vlaneseq
    %v103 = vshrl.u32 %v102, 7
    %v104 = vsub.s32 2, %v103
    %v105 = vrot.slane %v92, %v104
    %v106 = vlaneseq
    %v107 = vshrl.u32 %v106, 7
    %v108 = vsub.s32 3, %v107
    %v109 = vrot.slane %v92, %v108
    %v146 = vunpack.c.l.b16 %v60
    %v147 = vunpack.c.h.b16 %v60
    %v148 = vunpack.c.l.b16 %v61
    %v149 = vunpack.c.h.b16 %v61
    %v150 = vunpack.c.l.b16 %v62
    %v151 = vunpack.c.h.b16 %v62
    %v152 = vunpack.c.l.b16 %v63
    %v153 = vunpack.c.h.b16 %v63
    %v154 = vunpack.c.l.b16 %v64
    %v155 = vunpack.c.h.b16 %v64
    %v156 = vunpack.c.l.b16 %v65
    %v157 = vunpack.c.h.b16 %v65
    %v158 = vunpack.c.l.b16 %v66
    %v159 = vunpack.c.h.b16 %v66
    %v160 = vunpack.c.l.b16 %v67
    %v161 = vunpack.c.h.b16 %v67
    %v162 = vunpack.c.l.b16 %v68
    %v163 = vunpack.c.h.b16 %v68
    %v164 = vunpack.c.l.b16 %v69
    %v165 = vunpack.c.h.b16 %v69
    %v166 = vunpack.c.l.b16 %v70
    %v167 = vunpack.c.h.b16 %v70
    %v168 = vunpack.c.l.b16 %v71
    %v169 = vunpack.c.h.b16 %v71
    %v170 = vunpack.c.l.b16 %v72
    %v171 = vunpack.c.h.b16 %v72
    %v172 = vunpack.c.l.b16 %v73
    %v173 = vunpack.c.h.b16 %v73
    %v174 = vunpack.c.l.b16 %v74
    %v175 = vunpack.c.h.b16 %v74
    %v176 = vunpack.c.l.b16 %v75
    %v177 = vunpack.c.h.b16 %v75
    %v178 = vunpack.c.l.b16 %v76
    %v179 = vunpack.c.h.b16 %v76
    %v180 = vunpack.c.l.b16 %v77
    %v181 = vunpack.c.h.b16 %v77
    %v182 = vunpack.c.l.b16 %v78
    %v183 = vunpack.c.h.b16 %v78
    %v184 = vunpack.c.l.b16 %v79
    %v185 = vunpack.c.h.b16 %v79
    %v186 = vunpack.c.l.b16 %v80
    %v187 = vunpack.c.h.b16 %v80
    %v188 = vunpack.c.l.b16 %v81
    %v189 = vunpack.c.h.b16 %v81
    %v190 = vunpack.c.l.b16 %v82
    %v191 = vunpack.c.h.b16 %v82
    %v192 = vunpack.c.l.b16 %v83
    %v193 = vunpack.c.h.b16 %v83
    %v194 = vunpack.c.l.b16 %v84
    %v195 = vunpack.c.h.b16 %v84
    %v196 = vunpack.c.l.b16 %v85
    %v197 = vunpack.c.h.b16 %v85
    %v198 = vunpack.c.l.b16 %v86
    %v199 = vunpack.c.h.b16 %v86
    %v200 = vunpack.c.l.b16 %v87
    %v201 = vunpack.c.h.b16 %v87
    %v202 = vunpack.c.l.b16 %v88
    %v203 = vunpack.c.h.b16 %v88
    %v204 = vunpack.c.l.b16 %v89
    %v205 = vunpack.c.h.b16 %v89
    %v206 = vunpack.c.l.b16 %v90
    %v207 = vunpack.c.h.b16 %v90
    %v208 = vunpack.c.l.b16 %v91
    %v209 = vunpack.c.h.b16 %v91
    %v210 = vpack.c.b16 %v150, %v146
    %v211 = vpack.c.b16 %v151, %v147
    %v212 = vpack.c.b16 %v152, %v148
    %v213 = vpack.c.b16 %v153, %v149
    %v214 = vpack.c.b16 %v158, %v154
    %v215 = vpack.c.b16 %v159, %v155
    %v216 = vpack.c.b16 %v160, %v156
    %v217 = vpack.c.b16 %v161, %v157
    %v218 = vpack.c.b16 %v166, %v162
    %v219 = vpack.c.b16 %v167, %v163
    %v220 = vpack.c.b16 %v168, %v164
    %v221 = vpack.c.b16 %v169, %v165
    %v222 = vpack.c.b16 %v174, %v170
    %v223 = vpack.c.b16 %v175, %v171
    %v224 = vpack.c.b16 %v176, %v172
    %v225 = vpack.c.b16 %v177, %v173
    %v226 = vpack.c.b16 %v182, %v178
    %v227 = vpack.c.b16 %v183, %v179
    %v228 = vpack.c.b16 %v184, %v180
    %v229 = vpack.c.b16 %v185, %v181
    %v230 = vpack.c.b16 %v190, %v186
    %v231 = vpack.c.b16 %v191, %v187
    %v232 = vpack.c.b16 %v192, %v188
    %v233 = vpack.c.b16 %v193, %v189
    %v234 = vpack.c.b16 %v198, %v194
    %v235 = vpack.c.b16 %v199, %v195
    %v236 = vpack.c.b16 %v200, %v196
    %v237 = vpack.c.b16 %v201, %v197
    %v238 = vpack.c.b16 %v206, %v202
    %v239 = vpack.c.b16 %v207, %v203
    %v240 = vpack.c.b16 %v208, %v204
    %v241 = vpack.c.b16 %v209, %v205
    %274 = vmatprep.subr.bf16.mxu0 %v239
    %275 = vmatpush1.bf16.msra.mxu0 %v238
    %276 = vmatprep.subr.bf16.mxu0 %v235
    %277 = vmatpush1.bf16.msra.mxu0 %v234
    %278 = vmatprep.subr.bf16.mxu0 %v231
    %279 = vmatpush1.bf16.msra.mxu0 %v230
    %280 = vmatprep.subr.bf16.mxu0 %v227
    %281 = vmatpush1.bf16.msra.mxu0 %v226
    %282 = vmatprep.subr.bf16.mxu0 %v223
    %283 = vmatpush1.bf16.msra.mxu0 %v222
    %284 = vmatprep.subr.bf16.mxu0 %v219
    %285 = vmatpush1.bf16.msra.mxu0 %v218
    %286 = vmatprep.subr.bf16.mxu0 %v215
    %287 = vmatpush1.bf16.msra.mxu0 %v214
    %288 = vmatprep.subr.bf16.mxu0 %v211
    %289 = vmatpush1.bf16.msra.mxu0 %v210
    %290 = vmatprep.subr.bf16.mxu0 0
    %291 = vmatpush2.bf16.msra.mxu0 0
    %292 = vmatprep.subr.bf16.mxu0 0
    %293 = vmatpush2.bf16.msra.mxu0 0
    %294 = vmatprep.subr.bf16.mxu0 0
    %295 = vmatpush2.bf16.msra.mxu0 0
    %296 = vmatprep.subr.bf16.mxu0 0
    %297 = vmatpush2.bf16.msra.mxu0 0
    %298 = vmatprep.subr.bf16.mxu0 0
    %299 = vmatpush2.bf16.msra.mxu0 0
    %300 = vmatprep.subr.bf16.mxu0 0
    %301 = vmatpush2.bf16.msra.mxu0 0
    %302 = vmatprep.subr.bf16.mxu0 0
    %303 = vmatpush2.bf16.msra.mxu0 0
    %304 = vmatprep.subr.bf16.mxu0 0
    %305 = vmatpush2.bf16.msra.mxu0 0
    %306 = vmatprep.mubr.bf16.mxu0 0
    %307 = vmatmul.mubr.bf16.gmra.mxu0 %v59
    %v308 = vpop.f32.mrf.mxu0
    %v309 = vadd.f32 %v97, %v308
    %v310 = vpop.f32.mrf.mxu0
    %v311 = vadd.f32 %v101, %v310
    %v312 = vpop.f32.mrf.mxu0
    %v313 = vpop.f32.mrf.mxu0
    %314 = vdwg.mxu0
    %315 = vmatprep.subr.bf16.mxu0 %v241
    %316 = vmatpush1.bf16.msra.mxu0 %v240
    %317 = vmatprep.subr.bf16.mxu0 %v237
    %318 = vmatpush1.bf16.msra.mxu0 %v236
    %319 = vmatprep.subr.bf16.mxu0 %v233
    %320 = vmatpush1.bf16.msra.mxu0 %v232
    %321 = vmatprep.subr.bf16.mxu0 %v229
    %322 = vmatpush1.bf16.msra.mxu0 %v228
    %323 = vmatprep.subr.bf16.mxu0 %v225
    %324 = vmatpush1.bf16.msra.mxu0 %v224
    %325 = vmatprep.subr.bf16.mxu0 %v221
    %326 = vmatpush1.bf16.msra.mxu0 %v220
    %327 = vmatprep.subr.bf16.mxu0 %v217
    %328 = vmatpush1.bf16.msra.mxu0 %v216
    %329 = vmatprep.subr.bf16.mxu0 %v213
    %330 = vmatpush1.bf16.msra.mxu0 %v212
    %331 = vmatprep.subr.bf16.mxu0 0
    %332 = vmatpush2.bf16.msra.mxu0 0
    %333 = vmatprep.subr.bf16.mxu0 0
    %334 = vmatpush2.bf16.msra.mxu0 0
    %335 = vmatprep.subr.bf16.mxu0 0
    %336 = vmatpush2.bf16.msra.mxu0 0
    %337 = vmatprep.subr.bf16.mxu0 0
    %338 = vmatpush2.bf16.msra.mxu0 0
    %339 = vmatprep.subr.bf16.mxu0 0
    %340 = vmatpush2.bf16.msra.mxu0 0
    %341 = vmatprep.subr.bf16.mxu0 0
    %342 = vmatpush2.bf16.msra.mxu0 0
    %343 = vmatprep.subr.bf16.mxu0 0
    %344 = vmatpush2.bf16.msra.mxu0 0
    %345 = vmatprep.subr.bf16.mxu0 0
    %346 = vmatpush2.bf16.msra.mxu0 0
    %347 = vmatprep.mubr.bf16.mxu0 0
    %348 = vmatmul.mubr.bf16.gmra.mxu0 %v59
    %v349 = vpop.f32.mrf.mxu0
    %v350 = vadd.f32 %v105, %v349
    %v351 = vpop.f32.mrf.mxu0
    %v352 = vadd.f32 %v109, %v351
    %v353 = vpop.f32.mrf.mxu0
    %v354 = vpop.f32.mrf.mxu0
    %355 = vdwg.mxu0
    %v356 = vld [vmem:[%s3] sm:$0x1]
    %v357 = vld [vmem:[%s4] sm:$0x1]
    %vm358 = vcmask 1041408
    %v359 = vsel %vm358, %v309, 0.0
    %360 = vadd.xlane.f32.xlu0 %v359
    %v361 = vpop.xlane.xlu0 %360
    %v362 = vmul.f32 %v361, 0.0078125
    %v363 = vmul.f32 %v309, %v309
    %v364 = vsel %vm358, %v363, 0.0
    %365 = vadd.xlane.f32.xlu0 %v364
    %v366 = vpop.xlane.xlu0 %365
    %v367 = vmul.f32 %v366, 0.0078125
    %v368 = vmul.f32 %v362, %v362
    %v369 = vsub.f32 %v367, %v368
    %v370 = vmax.f32 %v369, 0.0
    %v371 = vsub.f32 %v309, %v362
    %v372 = vadd.f32 %v370, 1e-05
    %v373 = vrsqrt.pop %v372
    %v374 = vmul.f32 %v371, %v373
    %v376 = vlaneseq
    %v377 = vshrl.u32 %v376, 7
    %v378 = vsub.s32 0, %v377
    %v379 = vrot.slane %v356, %v378
    %v381 = vmul.f32 %v374, %v379
    %v383 = vlaneseq
    %v384 = vshrl.u32 %v383, 7
    %v385 = vsub.s32 0, %v384
    %v386 = vrot.slane %v357, %v385
    %v388 = vadd.f32 %v381, %v386
    %389 = vst [vmem:[#allocation8] sm:$0x3] %v388
    %v390 = vsel %vm358, %v311, 0.0
    %391 = vadd.xlane.f32.xlu0 %v390
    %v392 = vpop.xlane.xlu0 %391
    %v393 = vmul.f32 %v392, 0.0078125
    %v394 = vmul.f32 %v311, %v311
    %v395 = vsel %vm358, %v394, 0.0
    %396 = vadd.xlane.f32.xlu0 %v395
    %v397 = vpop.xlane.xlu0 %396
    %v398 = vmul.f32 %v397, 0.0078125
    %v399 = vmul.f32 %v393, %v393
    %v400 = vsub.f32 %v398, %v399
    %v401 = vmax.f32 %v400, 0.0
    %v402 = vsub.f32 %v311, %v393
    %v403 = vadd.f32 %v401, 1e-05
    %v404 = vrsqrt.pop %v403
    %v405 = vmul.f32 %v402, %v404
    %v406 = vmul.f32 %v405, %v379
    %v407 = vadd.f32 %v406, %v386
    %408 = vst [vmem:[#allocation8 + $0x2] sm:$0x3] %v407
    %v409 = vsel %vm358, %v350, 0.0
    %410 = vadd.xlane.f32.xlu0 %v409
    %v411 = vpop.xlane.xlu0 %410
    %v412 = vmul.f32 %v411, 0.0078125
    %v413 = vmul.f32 %v350, %v350
    %v414 = vsel %vm358, %v413, 0.0
    %415 = vadd.xlane.f32.xlu0 %v414
    %v416 = vpop.xlane.xlu0 %415
    %v417 = vmul.f32 %v416, 0.0078125
    %v418 = vmul.f32 %v412, %v412
    %v419 = vsub.f32 %v417, %v418
    %v420 = vmax.f32 %v419, 0.0
    %v421 = vsub.f32 %v350, %v412
    %v422 = vadd.f32 %v420, 1e-05
    %v423 = vrsqrt.pop %v422
    %v424 = vmul.f32 %v421, %v423
    %v425 = vmul.f32 %v424, %v379
    %v426 = vadd.f32 %v425, %v386
    %427 = vst [vmem:[#allocation8 + $0x4] sm:$0x3] %v426
    %v428 = vsel %vm358, %v352, 0.0
    %429 = vadd.xlane.f32.xlu0 %v428
    %v430 = vpop.xlane.xlu0 %429
    %v431 = vmul.f32 %v430, 0.0078125
    %v432 = vmul.f32 %v352, %v352
    %v433 = vsel %vm358, %v432, 0.0
    %434 = vadd.xlane.f32.xlu0 %v433
    %v435 = vpop.xlane.xlu0 %434
    %v436 = vmul.f32 %v435, 0.0078125
    %v437 = vmul.f32 %v431, %v431
    %v438 = vsub.f32 %v436, %v437
    %v439 = vmax.f32 %v438, 0.0
    %v440 = vsub.f32 %v352, %v431
    %v441 = vadd.f32 %v439, 1e-05
    %v442 = vrsqrt.pop %v441
    %v443 = vmul.f32 %v440, %v442
    %v444 = vmul.f32 %v443, %v379
    %v445 = vadd.f32 %v444, %v386
    %446 = vst [vmem:[#allocation8 + $0x6] sm:$0x3] %v445
    // Predicated region
    $region34: #{tpu_custom_call.1} parent=1 // pred_check
      _
    $region35: #{tpu_custom_call.1} parent=1 // pred_check_branch
      %448 = sbr.rel (0) target = $region37
    $region36: #{tpu_custom_call.1} parent=1 // pred_region
      %s450 = ssub.s32 128, 128
      %451 = vsyncadd [#allocation4], %s450
      %s453 = sshll.u32 [#allocation8], 4
      %s454 = int_to_ptr.vmem [resolvable:$true] %s453
      %456 = dma.vmem_to_hbm [thread:$0]  %s454, 128, %s5, [#allocation4]
    $region37: #{tpu_custom_call.1} parent=1 // pred_fallthru
      _
    // Predicated region
    $region38: #{tpu_custom_call.1} parent=1 // pred_check
      _
    $region39: #{tpu_custom_call.1} parent=1 // pred_check_branch
      %458 = sbr.rel (0) target = $region41
    $region40: #{tpu_custom_call.1} parent=1 // pred_region
      %459 = dma.done [#allocation4], 128
    $region41: #{tpu_custom_call.1} parent=1 // pred_fallthru
      _
    %460 = vsyncpa [#allocation3], 1
    %461 = vsyncpa [#allocation6], 1
    %462 = vsyncpa [#allocation4], 1

</llo_original>
